<compile_context>
chip_gen: v6e
topology: v6e:2x2x1
jax: 0.10.0
libtpu: 0.0.40
codegen_flags: <defaults>
</compile_context>

<pallas_src>
import functools

import jax
import jax.numpy as jnp
from jax import lax
from jax.experimental import pallas as pl
from jax.experimental.pallas import tpu as pltpu

# Default alpha from the PyTorch module (28 classes).
DEFAULT_ALPHA = [
    0.0313, 0.0006, 0.0723, 0.013, 0.0109, 0.3132, 0.008, 0.0037,
    0.1174, 0.0008, 0.0098, 0.1566, 0.0184, 0.0522, 0.0058, 0.0294,
    0.0075, 0.0012, 0.0018, 0.0014, 0.0048, 0.0136, 0.0494, 0.0218,
    0.0007, 0.0494, 0.0022, 0.0026,
]


def _round_up(x, m):
    return (x + m - 1) // m * m


def _focal_loss_kernel(pred_ref, tgt_ref, alpha_t_ref, out_ref, *,
                       gamma, tile_n, n_valid):
    pred = pred_ref[...].astype(jnp.float32)        # (T, C) native dtype -> f32 in-kernel
    tgt = tgt_ref[...]                              # (T, 1) int32
    alpha_t = alpha_t_ref[...]                      # (T, 1) f32, pre-gathered alpha[target]

    # Stable softmax pieces along the class (lane) axis.
    m = jnp.max(pred, axis=-1, keepdims=True)       # (T, 1)
    e = jnp.exp(pred - m)                           # (T, C)  -- the only (T,C) EUP op
    sum_e = jnp.sum(e, axis=-1, keepdims=True)      # (T, 1)

    # One-hot gather of the target column (cross-lane gather via masked reduce).
    col = lax.broadcasted_iota(jnp.int32, pred.shape, 1)
    onehot = (col == tgt).astype(jnp.float32)       # (T, C)
    pred_t = jnp.sum(pred * onehot, axis=-1, keepdims=True)   # pred[i, target[i]]
    e_t = jnp.sum(e * onehot, axis=-1, keepdims=True)         # exp(shifted)[i, target[i]]

    # logpt / pt without materializing log_softmax and without a second exp.
    logpt = pred_t - m - jnp.log(sum_e)             # (T, 1)
    pt = e_t * pl.reciprocal(sum_e, approx=False)   # (T, 1)
    ce = -logpt

    one_minus_pt = 1.0 - pt
    g = float(gamma)
    if g == int(g) and int(g) >= 0:
        w = lax.integer_pow(one_minus_pt, int(g))   # VALU; no log(0) edge at pt == 1
    else:
        w = jnp.power(jnp.maximum(one_minus_pt, 0.0), jnp.float32(g))

    # Explicitly mask tail / padding rows of the last block.
    row = lax.broadcasted_iota(jnp.int32, (tile_n, 1), 0) + pl.program_id(0) * tile_n
    valid = (row < n_valid).astype(jnp.float32)

    partial = jnp.sum(alpha_t * w * ce * valid)     # scalar partial sum for this block

    # Lane-dense (8,128) output block; wrapper reads element [0, 0] of each block.
    out_ref[...] = jnp.full((8, 128), partial, dtype=jnp.float32)


def multi_class_focal_loss(pred, target, alpha, gamma=2.0, reduction="mean",
                           tile_n=2048):
    """pred: (N, C) float (any dtype), target: (N,) int, alpha: (C,) float -> scalar."""
    n, c = pred.shape
    alpha_f32 = jnp.asarray(alpha, jnp.float32)
    alpha_t = alpha_f32[target].reshape(n, 1)               # (N, 1) pre-gathered
    target_2d = target.reshape(n, 1).astype(jnp.int32)

    # Tile rows: multiple of 32 sublanes (covers f32 / bf16 / int8 packing);
    # shrink for tiny N so we don't compute on a mostly-padded tile.
    tile_n = max(32, min(_round_up(tile_n, 32), _round_up(n, 32)))
    num_blocks = pl.cdiv(n, tile_n)
    n_pad = num_blocks * tile_n
    if n_pad != n:
        pred = jnp.pad(pred, ((0, n_pad - n), (0, 0)))
        target_2d = jnp.pad(target_2d, ((0, n_pad - n), (0, 0)))
        alpha_t = jnp.pad(alpha_t, ((0, n_pad - n), (0, 0)))

    cost = pl.CostEstimate(
        flops=8 * n_pad * c,
        transcendentals=n_pad * c + 2 * n_pad,
        bytes_accessed=n_pad * c * pred.dtype.itemsize + 8 * n_pad
                       + num_blocks * 8 * 128 * 4,
    )

    out = pl.pallas_call(
        functools.partial(_focal_loss_kernel, gamma=float(gamma),
                          tile_n=tile_n, n_valid=n),
        out_shape=jax.ShapeDtypeStruct((num_blocks * 8, 128), jnp.float32),
        grid=(num_blocks,),
        in_specs=[
            pl.BlockSpec((tile_n, c), lambda i: (i, 0)),   # pred tile (native dtype)
            pl.BlockSpec((tile_n, 1), lambda i: (i, 0)),   # target tile
            pl.BlockSpec((tile_n, 1), lambda i: (i, 0)),   # pre-gathered alpha tile
        ],
        out_specs=pl.BlockSpec((8, 128), lambda i: (i, 0)),
        compiler_params=pltpu.CompilerParams(dimension_semantics=("parallel",)),
        cost_estimate=cost,
    )(pred, target_2d, alpha_t)

    partial_sums = out[0::8, 0]          # one partial sum per grid block
    total = jnp.sum(partial_sums)
    if reduction == "mean":
        return total / n
    if reduction == "sum":
        return total
    # TODO(synk): reduction='none' (per-sample (N,) losses) needs a per-row output
    # spec; only 'mean'/'sum' are implemented here.
    raise NotImplementedError("reduction='none' not implemented in the Pallas kernel")


def _reference(pred, target, alpha, gamma=2.0):
    log_sm = jax.nn.log_softmax(pred.astype(jnp.float32), axis=1)
    logpt = jnp.take_along_axis(log_sm, target.reshape(-1, 1), axis=1).reshape(-1)
    ce = -logpt
    pt = jnp.exp(logpt)
    a = alpha[target]
    return jnp.mean(a * (1.0 - pt) ** gamma * ce)


if __name__ == "__main__":
    key = jax.random.PRNGKey(0)
    k1, k2, k3, k4 = jax.random.split(key, 4)
    C = len(DEFAULT_ALPHA)
    alpha = jnp.asarray(DEFAULT_ALPHA, dtype=jnp.float32)

    # Test 1: small f32 batch (the module implies (N, 28) logits, (N,) int labels).
    N1 = 8
    pred1 = jax.random.normal(k1, (N1, C), dtype=jnp.float32)
    tgt1 = jax.random.randint(k2, (N1,), 0, C, dtype=jnp.int32)
    loss1 = jax.block_until_ready(multi_class_focal_loss(pred1, tgt1, alpha, gamma=2.0))
    ref1 = _reference(pred1, tgt1, alpha, gamma=2.0)
    assert jnp.allclose(loss1, ref1, rtol=1e-5, atol=1e-6), (loss1, ref1)

    # Test 2: multi-block grid + tail-row masking + native bf16 DMA.
    N2 = 300
    pred2 = jax.random.normal(k3, (N2, C), dtype=jnp.float32).astype(jnp.bfloat16)
    tgt2 = jax.random.randint(k4, (N2,), 0, C, dtype=jnp.int32)
    loss2 = jax.block_until_ready(
        multi_class_focal_loss(pred2, tgt2, alpha, gamma=2.0, tile_n=128))
    ref2 = _reference(pred2.astype(jnp.float32), tgt2, alpha, gamma=2.0)
    assert jnp.allclose(loss2, ref2, rtol=1e-4, atol=1e-5), (loss2, ref2)

    print("KERNEL_OK")
</pallas_src>

<mosaic_0001>
module attributes {stable_mosaic.version = 11 : i64} {
  func.func @_focal_loss_kernel(%arg0: i32, %arg1: memref<32x28xf32, #tpu.memory_space<vmem>>, %arg2: memref<32x1xi32, #tpu.memory_space<vmem>>, %arg3: memref<32x1xf32, #tpu.memory_space<vmem>>, %arg4: memref<8x128xf32, #tpu.memory_space<vmem>>) attributes {dimension_semantics = [#tpu.dimension_semantics<parallel>], iteration_bounds = array<i64: 1>, scalar_prefetch = 0 : i64, scratch_operands = 0 : i64, tpu.core_type = #tpu.core_type<tc>, window_params = [{transform_indices = @transform_0, window_bounds = array<i64: 32, 28>}, {transform_indices = @transform_1, window_bounds = array<i64: 32, 1>}, {transform_indices = @transform_2, window_bounds = array<i64: 32, 1>}, {transform_indices = @transform_3, window_bounds = array<i64: 8, 128>}]} {
    %c0 = arith.constant 0 : index
    %c0_0 = arith.constant 0 : index
    %0 = vector.load %arg1[%c0, %c0_0] : memref<32x28xf32, #tpu.memory_space<vmem>>, vector<32x28xf32>
    %c0_1 = arith.constant 0 : index
    %c0_2 = arith.constant 0 : index
    %1 = vector.load %arg2[%c0_1, %c0_2] : memref<32x1xi32, #tpu.memory_space<vmem>>, vector<32x1xi32>
    %c0_3 = arith.constant 0 : index
    %c0_4 = arith.constant 0 : index
    %2 = vector.load %arg3[%c0_3, %c0_4] : memref<32x1xf32, #tpu.memory_space<vmem>>, vector<32x1xf32>
    %cst = arith.constant dense<0xFF800000> : vector<32xf32>
    %3 = vector.multi_reduction <maximumf>, %0, %cst [1] : vector<32x28xf32> to vector<32xf32>
    %4 = vector.shape_cast %3 : vector<32xf32> to vector<32x1xf32>
    %5 = vector.broadcast %4 : vector<32x1xf32> to vector<32x28xf32>
    %6 = arith.subf %0, %5 : vector<32x28xf32>
    %7 = math.exp %6 : vector<32x28xf32>
    %cst_5 = arith.constant dense<0.000000e+00> : vector<32xf32>
    %8 = vector.multi_reduction <add>, %7, %cst_5 [1] : vector<32x28xf32> to vector<32xf32>
    %9 = vector.shape_cast %8 : vector<32xf32> to vector<32x1xf32>
    %10 = tpu.iota {dimensions = array<i32: 1>} : vector<32x28xi32>
    %11 = vector.broadcast %1 : vector<32x1xi32> to vector<32x28xi32>
    %12 = arith.cmpi eq, %10, %11 : vector<32x28xi32>
    %13 = arith.extui %12 : vector<32x28xi1> to vector<32x28xi32>
    %14 = arith.sitofp %13 : vector<32x28xi32> to vector<32x28xf32>
    %15 = arith.mulf %0, %14 : vector<32x28xf32>
    %cst_6 = arith.constant dense<0.000000e+00> : vector<32xf32>
    %16 = vector.multi_reduction <add>, %15, %cst_6 [1] : vector<32x28xf32> to vector<32xf32>
    %17 = vector.shape_cast %16 : vector<32xf32> to vector<32x1xf32>
    %18 = arith.mulf %7, %14 : vector<32x28xf32>
    %cst_7 = arith.constant dense<0.000000e+00> : vector<32xf32>
    %19 = vector.multi_reduction <add>, %18, %cst_7 [1] : vector<32x28xf32> to vector<32xf32>
    %20 = vector.shape_cast %19 : vector<32xf32> to vector<32x1xf32>
    %21 = arith.subf %17, %4 : vector<32x1xf32>
    %22 = math.log %9 : vector<32x1xf32>
    %23 = arith.subf %21, %22 : vector<32x1xf32>
    %24 = tpu.reciprocal %9 : vector<32x1xf32> -> vector<32x1xf32>
    %25 = arith.mulf %20, %24 : vector<32x1xf32>
    %cst_8 = arith.constant 0.000000e+00 : f32
    %26 = vector.broadcast %cst_8 : f32 to vector<32x1xf32>
    %27 = arith.subf %26, %23 : vector<32x1xf32>
    %cst_9 = arith.constant 1.000000e+00 : f32
    %28 = vector.broadcast %cst_9 : f32 to vector<32x1xf32>
    %29 = arith.subf %28, %25 : vector<32x1xf32>
    %30 = arith.mulf %29, %29 : vector<32x1xf32>
    %31 = tpu.iota {dimensions = array<i32: 0>} : vector<32x1xi32>
    %c32_i32 = arith.constant 32 : i32
    %32 = arith.muli %arg0, %c32_i32 : i32
    %33 = vector.broadcast %32 : i32 to vector<32x1xi32>
    %34 = arith.addi %31, %33 : vector<32x1xi32>
    %c8_i32 = arith.constant 8 : i32
    %35 = vector.broadcast %c8_i32 : i32 to vector<32x1xi32>
    %36 = arith.cmpi slt, %34, %35 : vector<32x1xi32>
    %37 = arith.extui %36 : vector<32x1xi1> to vector<32x1xi32>
    %38 = arith.sitofp %37 : vector<32x1xi32> to vector<32x1xf32>
    %39 = arith.mulf %2, %30 : vector<32x1xf32>
    %40 = arith.mulf %39, %27 : vector<32x1xf32>
    %41 = arith.mulf %40, %38 : vector<32x1xf32>
    %42 = vector.shape_cast %41 : vector<32x1xf32> to vector<1x32x1xf32>
    %cst_10 = arith.constant dense<0.000000e+00> : vector<1xf32>
    %43 = vector.multi_reduction <add>, %42, %cst_10 [1, 2] : vector<1x32x1xf32> to vector<1xf32>
    %44 = vector.shape_cast %43 : vector<1xf32> to vector<1x1x1xf32>
    %45 = vector.extract %44[0, 0, 0] : f32 from vector<1x1x1xf32>
    %46 = vector.broadcast %45 : f32 to vector<8x128xf32>
    %c0_11 = arith.constant 0 : index
    %c0_12 = arith.constant 0 : index
    %47 = vector.load %arg4[%c0_11, %c0_12] : memref<8x128xf32, #tpu.memory_space<vmem>>, vector<8x128xf32>
    tpu.vector_store %arg4[%c0_11, %c0_12], %46 {strides = array<i32>} : memref<8x128xf32, #tpu.memory_space<vmem>>, vector<8x128xf32>,
    return
  }
  func.func @transform_0(%arg0: i32) -> (i32, i32) {
    %c0_i32 = arith.constant 0 : i32
    %c0_i32_0 = arith.constant 0 : i32
    return %arg0, %c0_i32 : i32, i32
  }
  func.func @transform_1(%arg0: i32) -> (i32, i32) {
    %c0_i32 = arith.constant 0 : i32
    %c0_i32_0 = arith.constant 0 : i32
    return %arg0, %c0_i32 : i32, i32
  }
  func.func @transform_2(%arg0: i32) -> (i32, i32) {
    %c0_i32 = arith.constant 0 : i32
    %c0_i32_0 = arith.constant 0 : i32
    return %arg0, %c0_i32 : i32, i32
  }
  func.func @transform_3(%arg0: i32) -> (i32, i32) {
    %c0_i32 = arith.constant 0 : i32
    %c0_i32_0 = arith.constant 0 : i32
    return %arg0, %c0_i32 : i32, i32
  }
}

</mosaic_0001>

<llo_original>
// kernel: tpu_custom_call.1
$region0: #{tpu_custom_call.1}
  #allocation0 [shape = 'u32[]', space=smem, size = 0x4, offset = 0x4, fixed_abs, tag = 'smem constant byte address 0x4 - core index']
  #allocation1 [shape = 'u32[144,128]{1,0:T(1,128)}', space=vmem, size = 0x12000, scoped, tag = 'internal scratch']
  %s0 = inlined_call_operand.vmem [shape: f32[32,28], index: 0, kind: input, shape index: {}]
  %s1 = inlined_call_operand.vmem [shape: s32[32,1], index: 1, kind: input, shape index: {}]
  %s2 = inlined_call_operand.vmem [shape: f32[32,1], index: 2, kind: input, shape index: {}]
  %s3 = inlined_call_operand.hbm [shape: f32[8,128], index: 3, kind: output, shape index: {}]
  %s4 = sld [smem:[#allocation0]]
  $region22: #{tpu_custom_call.1} parent=0
    _
  %s6 = ssub.s32 1, %s4
  %s7 = scalar_select 0, %s6, %s4
  $region1: #{tpu_custom_call.1} parent=0
    #allocation2 [shape = 'u8[4096]{0}', space=vmem, size = 0x1000, scoped, tag = 'output window, operand 0, single buffered']
    #allocation3 [shape = 's32[1]{0}', space=sflag, size = 0x4, scoped, tag = 'scoped memory for tpu_custom_call.1']
    %8 = vsyncpa [#allocation3], 0
    // Predicated region
    $region2: #{tpu_custom_call.1} parent=1 // pred_check
      _
    $region3: #{tpu_custom_call.1} parent=1 // pred_check_branch
      %10 = sbr.rel (0) target = $region5
    $region4: #{tpu_custom_call.1} parent=1 // pred_region
      _
    $region5: #{tpu_custom_call.1} parent=1 // pred_fallthru
      _
    // Predicated region
    $region6: #{tpu_custom_call.1} parent=1 // pred_check
      _
    $region7: #{tpu_custom_call.1} parent=1 // pred_check_branch
      %12 = sbr.rel (0) target = $region9
    $region8: #{tpu_custom_call.1} parent=1 // pred_region
      _
    $region9: #{tpu_custom_call.1} parent=1 // pred_fallthru
      _
    // Predicated region
    $region10: #{tpu_custom_call.1} parent=1 // pred_check
      _
    $region11: #{tpu_custom_call.1} parent=1 // pred_check_branch
      %14 = sbr.rel (0) target = $region13
    $region12: #{tpu_custom_call.1} parent=1 // pred_region
      _
    $region13: #{tpu_custom_call.1} parent=1 // pred_fallthru
      _
    %v15 = vld [vmem:[%s0] sm:$0xff]
    %v16 = vld [vmem:[%s0 + $0x8] sm:$0xff]
    %v17 = vld [vmem:[%s0 + $0x10] sm:$0xff]
    %v18 = vld [vmem:[%s0 + $0x18] sm:$0xff]
    %v19 = vld [vmem:[%s1] sm:$0xff]
    %v20 = vld [vmem:[%s1 + $0x8] sm:$0xff]
    %v21 = vld [vmem:[%s1 + $0x10] sm:$0xff]
    %v22 = vld [vmem:[%s1 + $0x18] sm:$0xff]
    %v23 = vld [vmem:[%s2] sm:$0xff]
    %v24 = vld [vmem:[%s2 + $0x8] sm:$0xff]
    %v25 = vld [vmem:[%s2 + $0x10] sm:$0xff]
    %v26 = vld [vmem:[%s2 + $0x18] sm:$0xff]
    %vm27 = vcmask 228352
    %v28 = vsel %vm27, %v15, -inf
    %29 = vmax.xlane.f32.xlu0 %v28
    %v30 = vpop.xlane.xlu0 %29
    %v31 = vsel %vm27, %v16, -inf
    %32 = vmax.xlane.f32.xlu0 %v31
    %v33 = vpop.xlane.xlu0 %32
    %v34 = vsel %vm27, %v17, -inf
    %35 = vmax.xlane.f32.xlu0 %v34
    %v36 = vpop.xlane.xlu0 %35
    %v37 = vsel %vm27, %v18, -inf
    %38 = vmax.xlane.f32.xlu0 %v37
    %v39 = vpop.xlane.xlu0 %38
    %v40 = vsub.f32 %v15, %v30
    %v41 = vsub.f32 %v16, %v33
    %v42 = vsub.f32 %v17, %v36
    %v43 = vsub.f32 %v18, %v39
    %v44 = vmul.f32 %v40, 1.442695
    %v45 = vpow.pop %v44
    %v46 = vmul.f32 %v41, 1.442695
    %v47 = vpow.pop %v46
    %v48 = vmul.f32 %v42, 1.442695
    %v49 = vpow.pop %v48
    %v50 = vmul.f32 %v43, 1.442695
    %v51 = vpow.pop %v50
    %v52 = vsel %vm27, %v45, 0.0
    %53 = vadd.xlane.f32.xlu0 %v52
    %v54 = vpop.xlane.xlu0 %53
    %v55 = vsel %vm27, %v47, 0.0
    %56 = vadd.xlane.f32.xlu0 %v55
    %v57 = vpop.xlane.xlu0 %56
    %v58 = vsel %vm27, %v49, 0.0
    %59 = vadd.xlane.f32.xlu0 %v58
    %v60 = vpop.xlane.xlu0 %59
    %v61 = vsel %vm27, %v51, 0.0
    %62 = vadd.xlane.f32.xlu0 %v61
    %v63 = vpop.xlane.xlu0 %62
    %v64 = vlaneseq
    %v65 = vand.u32 %v64, 127
    %66 = vset.pattern.permute.xlu0 0
    %67 = vperm.xlu0 %66, %v19
    %v68 = vpop.permute.xlu0 %67
    %69 = vset.pattern.permute.xlu0 0
    %70 = vperm.xlu0 %69, %v20
    %v71 = vpop.permute.xlu0 %70
    %72 = vset.pattern.permute.xlu0 0
    %73 = vperm.xlu0 %72, %v21
    %v74 = vpop.permute.xlu0 %73
    %75 = vset.pattern.permute.xlu0 0
    %76 = vperm.xlu0 %75, %v22
    %v77 = vpop.permute.xlu0 %76
    %vm78 = vcmp.eq.s32.totalorder %v65, %v68
    %vm79 = vcmp.eq.s32.totalorder %v65, %v71
    %vm80 = vcmp.eq.s32.totalorder %v65, %v74
    %vm81 = vcmp.eq.s32.totalorder %v65, %v77
    %v82 = vsel %vm78, 1, 0
    %v83 = vsel %vm79, 1, 0
    %v84 = vsel %vm80, 1, 0
    %v85 = vsel %vm81, 1, 0
    %v86 = vcvt.s32.f32 %v82
    %v87 = vcvt.s32.f32 %v83
    %v88 = vcvt.s32.f32 %v84
    %v89 = vcvt.s32.f32 %v85
    %v90 = vmul.f32 %v15, %v86
    %v91 = vmul.f32 %v16, %v87
    %v92 = vmul.f32 %v17, %v88
    %v93 = vmul.f32 %v18, %v89
    %v94 = vsel %vm27, %v90, 0.0
    %95 = vadd.xlane.f32.xlu0 %v94
    %v96 = vpop.xlane.xlu0 %95
    %v97 = vsel %vm27, %v91, 0.0
    %98 = vadd.xlane.f32.xlu0 %v97
    %v99 = vpop.xlane.xlu0 %98
    %v100 = vsel %vm27, %v92, 0.0
    %101 = vadd.xlane.f32.xlu0 %v100
    %v102 = vpop.xlane.xlu0 %101
    %v103 = vsel %vm27, %v93, 0.0
    %104 = vadd.xlane.f32.xlu0 %v103
    %v105 = vpop.xlane.xlu0 %104
    %v106 = vmul.f32 %v45, %v86
    %v107 = vmul.f32 %v47, %v87
    %v108 = vmul.f32 %v49, %v88
    %v109 = vmul.f32 %v51, %v89
    %v110 = vsel %vm27, %v106, 0.0
    %111 = vadd.xlane.f32.xlu0 %v110
    %v112 = vpop.xlane.xlu0 %111
    %v113 = vsel %vm27, %v107, 0.0
    %114 = vadd.xlane.f32.xlu0 %v113
    %v115 = vpop.xlane.xlu0 %114
    %v116 = vsel %vm27, %v108, 0.0
    %117 = vadd.xlane.f32.xlu0 %v116
    %v118 = vpop.xlane.xlu0 %117
    %v119 = vsel %vm27, %v109, 0.0
    %120 = vadd.xlane.f32.xlu0 %v119
    %v121 = vpop.xlane.xlu0 %120
    %v122 = vsub.f32 %v96, %v30
    %v123 = vsub.f32 %v99, %v33
    %v124 = vsub.f32 %v102, %v36
    %v125 = vsub.f32 %v105, %v39
    %v126 = vlog2.pop %v54
    %v127 = vmul.f32 %v126, 0.6931472
    %v128 = vlog2.pop %v57
    %v129 = vmul.f32 %v128, 0.6931472
    %v130 = vlog2.pop %v60
    %v131 = vmul.f32 %v130, 0.6931472
    %v132 = vlog2.pop %v63
    %v133 = vmul.f32 %v132, 0.6931472
    %v134 = vsub.f32 %v122, %v127
    %v135 = vsub.f32 %v123, %v129
    %v136 = vsub.f32 %v124, %v131
    %v137 = vsub.f32 %v125, %v133
    %v138 = vrcp.pop %v54
    %v139 = vrcp.pop %v57
    %v140 = vrcp.pop %v60
    %v141 = vrcp.pop %v63
    %v142 = vmul.f32 %v112, %v138
    %v143 = vmul.f32 %v115, %v139
    %v144 = vmul.f32 %v118, %v140
    %v145 = vmul.f32 %v121, %v141
    %v146 = vsub.f32 0.0, %v134
    %v147 = vsub.f32 0.0, %v135
    %v148 = vsub.f32 0.0, %v136
    %v149 = vsub.f32 0.0, %v137
    %v150 = vsub.f32 1.0, %v142
    %v151 = vsub.f32 1.0, %v143
    %v152 = vsub.f32 1.0, %v144
    %v153 = vsub.f32 1.0, %v145
    %v154 = vmul.f32 %v150, %v150
    %v155 = vmul.f32 %v151, %v151
    %v156 = vmul.f32 %v152, %v152
    %v157 = vmul.f32 %v153, %v153
    %v158 = vlaneseq
    %v159 = vshrl.u32 %v158, 7
    %v160 = vadd.s32 %v159, 8
    %v161 = vadd.s32 %v159, 16
    %v162 = vadd.s32 %v159, 24
    %s163 = smul.u32 0, 32
    %v164 = vstv %s163
    %v165 = vadd.s32 %v159, %v164
    %v166 = vadd.s32 %v160, %v164
    %v167 = vadd.s32 %v161, %v164
    %v168 = vadd.s32 %v162, %v164
    %vm169 = vcmp.lt.s32.totalorder %v165, 8
    %vm170 = vcmp.lt.s32.totalorder %v166, 8
    %vm171 = vcmp.lt.s32.totalorder %v167, 8
    %vm172 = vcmp.lt.s32.totalorder %v168, 8
    %v173 = vsel %vm169, 1, 0
    %v174 = vsel %vm170, 1, 0
    %v175 = vsel %vm171, 1, 0
    %v176 = vsel %vm172, 1, 0
    %v177 = vcvt.s32.f32 %v173
    %v178 = vcvt.s32.f32 %v174
    %v179 = vcvt.s32.f32 %v175
    %v180 = vcvt.s32.f32 %v176
    %v181 = vmul.f32 %v23, %v154
    %v182 = vmul.f32 %v24, %v155
    %v183 = vmul.f32 %v25, %v156
    %v184 = vmul.f32 %v26, %v157
    %v185 = vmul.f32 %v181, %v146
    %v186 = vmul.f32 %v182, %v147
    %v187 = vmul.f32 %v183, %v148
    %v188 = vmul.f32 %v184, %v149
    %v189 = vmul.f32 %v185, %v177
    %v190 = vmul.f32 %v186, %v178
    %v191 = vmul.f32 %v187, %v179
    %v192 = vmul.f32 %v188, %v180
    %vm193 = vcmask 7168
    %v194 = vsel %vm193, %v189, 0.0
    %v195 = vsel %vm193, %v190, 0.0
    %v196 = vadd.f32 %v194, %v195
    %v197 = vsel %vm193, %v191, 0.0
    %v198 = vadd.f32 %v196, %v197
    %v199 = vsel %vm193, %v192, 0.0
    %v200 = vadd.f32 %v198, %v199
    %201 = vadd.xlane.f32.xlu0 %v200
    %v202 = vpop.xlane.xlu0 %201
    %v203 = vrot.slane %v202, 4
    %v204 = vadd.f32 %v202, %v203
    %v205 = vrot.slane %v204, 2
    %v206 = vadd.f32 %v204, %v205
    %v207 = vrot.slane %v206, 1
    %v208 = vadd.f32 %v206, %v207
    %s209 = vtos %v208
    %v210 = vstv %s209
    %211 = vst [vmem:[#allocation2] sm:$0xff] %v210
    // Predicated region
    $region14: #{tpu_custom_call.1} parent=1 // pred_check
      _
    $region15: #{tpu_custom_call.1} parent=1 // pred_check_branch
      %213 = sbr.rel (0) target = $region17
    $region16: #{tpu_custom_call.1} parent=1 // pred_region
      %s215 = ssub.s32 128, 128
      %216 = vsyncadd [#allocation3], %s215
      %s218 = sshll.u32 [#allocation2], 4
      %s219 = int_to_ptr.vmem [resolvable:$true] %s218
      %221 = dma.vmem_to_hbm [thread:$0]  %s219, 128, %s3, [#allocation3]
    $region17: #{tpu_custom_call.1} parent=1 // pred_fallthru
      _
    // Predicated region
    $region18: #{tpu_custom_call.1} parent=1 // pred_check
      _
    $region19: #{tpu_custom_call.1} parent=1 // pred_check_branch
      %223 = sbr.rel (0) target = $region21
    $region20: #{tpu_custom_call.1} parent=1 // pred_region
      %224 = dma.done [#allocation3], 128
    $region21: #{tpu_custom_call.1} parent=1 // pred_fallthru
      _
    %225 = vsyncpa [#allocation3], 1

</llo_original>
